<compile_context>
chip_gen: v7x
topology: tpu7x:2x2x1
jax: 0.10.0
libtpu: 0.0.40
codegen_flags: <defaults>
</compile_context>

<pallas_src>
import jax
import jax.numpy as jnp
from jax.experimental import pallas as pl
from jax.experimental.pallas import tpu as pltpu


# ----------------------------- Pallas kernel --------------------------------

def channel_attention_kernel(x_ref, w1_ref, b1_ref, w2_ref, b2_ref, o_ref):
    """Fused ChannelAttention for one batch sample.

    x_ref:  (1, C, HW)  input block (NCHW with H*W flattened into lanes).
    w1_ref: (Cmid, C)   squeeze 1x1-conv weight.
    b1_ref: (Cmid, 1)   squeeze bias.
    w2_ref: (C, Cmid)   excite  1x1-conv weight.
    b2_ref: (C, 1)      excite bias.
    o_ref:  (1, C, HW)  output block = x * sigmoid(scale).
    """
    x = x_ref[0].astype(jnp.float32)                        # (C, HW)

    # AdaptiveAvgPool2d(1): per-channel mean over the spatial (lane) axis.
    pooled = jnp.mean(x, axis=1, keepdims=True)             # (C, 1)

    # 1x1 conv (C -> Cmid) + ReLU.
    h = jnp.dot(w1_ref[...], pooled, preferred_element_type=jnp.float32)
    h = jnp.maximum(h + b1_ref[...], 0.0)                   # (Cmid, 1)

    # 1x1 conv (Cmid -> C) + Sigmoid.
    s = jnp.dot(w2_ref[...], h, preferred_element_type=jnp.float32)
    scale = jax.nn.sigmoid(s + b2_ref[...])                 # (C, 1)

    # Broadcast multiply over the lane (spatial) axis; lane-dense store.
    o_ref[0] = (x * scale).astype(o_ref.dtype)


# ------------------------------- wrapper -------------------------------------

@jax.jit
def channel_attention(x_nchw, w1, b1, w2, b2):
    """x_nchw: (N, C, H, W) -> (N, C, H, W).  Matches torch ChannelAttention.

    Weight layouts (mapping from the torch module):
      w1 = attention[1].weight[:, :, 0, 0]   shape (C//sq, C)
      b1 = attention[1].bias[:, None]        shape (C//sq, 1)
      w2 = attention[3].weight[:, :, 0, 0]   shape (C, C//sq)
      b2 = attention[3].bias[:, None]        shape (C, 1)
    """
    N, C, H, W = x_nchw.shape
    Cmid = w1.shape[0]
    HW = H * W

    x2 = x_nchw.reshape(N, C, HW)                           # free (contiguous)

    out = pl.pallas_call(
        channel_attention_kernel,
        out_shape=jax.ShapeDtypeStruct((N, C, HW), x_nchw.dtype),
        grid=(N,),
        in_specs=[
            pl.BlockSpec((1, C, HW), lambda n: (n, 0, 0)),
            pl.BlockSpec((Cmid, C), lambda n: (0, 0)),
            pl.BlockSpec((Cmid, 1), lambda n: (0, 0)),
            pl.BlockSpec((C, Cmid), lambda n: (0, 0)),
            pl.BlockSpec((C, 1), lambda n: (0, 0)),
        ],
        out_specs=pl.BlockSpec((1, C, HW), lambda n: (n, 0, 0)),
        compiler_params=pltpu.CompilerParams(
            dimension_semantics=("parallel",)),
    )(x2, w1, b1, w2, b2)

    return out.reshape(N, C, H, W)


# --------------------------- pure-JAX reference -------------------------------

def _ref_channel_attention(x, w1, b1, w2, b2):
    pooled = jnp.mean(x, axis=(2, 3))                          # (N, C)
    h = jnp.maximum(pooled @ w1.T + b1.reshape(1, -1), 0.0)    # (N, Cmid)
    s = jax.nn.sigmoid(h @ w2.T + b2.reshape(1, -1))           # (N, C)
    return x * s[:, :, None, None]


# ---------------------------------- main --------------------------------------

if __name__ == "__main__":
    # num_feat = 32, squeeze_factor = 16 (the module default) -> mid channels = 2.
    N, C, H, W = 2, 32, 16, 16
    SQ = 16
    Cmid = C // SQ

    key = jax.random.PRNGKey(0)
    kx, k1, kb1, k2, kb2 = jax.random.split(key, 5)
    x = jax.random.normal(kx, (N, C, H, W), jnp.float32)
    w1 = 0.2 * jax.random.normal(k1, (Cmid, C), jnp.float32)
    b1 = 0.2 * jax.random.normal(kb1, (Cmid, 1), jnp.float32)
    w2 = 0.2 * jax.random.normal(k2, (C, Cmid), jnp.float32)
    b2 = 0.2 * jax.random.normal(kb2, (C, 1), jnp.float32)

    out = channel_attention(x, w1, b1, w2, b2)
    out = jax.block_until_ready(out)
    assert out.shape == (N, C, H, W), out.shape

    ref = _ref_channel_attention(x, w1, b1, w2, b2)
    err = float(jnp.max(jnp.abs(out - ref)))
    assert jnp.allclose(out, ref, atol=1e-5, rtol=1e-5), err

    print("KERNEL_OK")
</pallas_src>

<mosaic_0001>
module attributes {stable_mosaic.version = 11 : i64} {
  func.func @channel_attention_kernel(%arg0: i32, %arg1: memref<1x32x256xf32, #tpu.memory_space<vmem>>, %arg2: memref<2x32xf32, #tpu.memory_space<vmem>>, %arg3: memref<2x1xf32, #tpu.memory_space<vmem>>, %arg4: memref<32x2xf32, #tpu.memory_space<vmem>>, %arg5: memref<32x1xf32, #tpu.memory_space<vmem>>, %arg6: memref<1x32x256xf32, #tpu.memory_space<vmem>>) attributes {dimension_semantics = [#tpu.dimension_semantics<parallel>], iteration_bounds = array<i64: 2>, scalar_prefetch = 0 : i64, scratch_operands = 0 : i64, tpu.core_type = #tpu.core_type<tc>, window_params = [{transform_indices = @transform_0, window_bounds = array<i64: 1, 32, 256>}, {pipeline_mode = #tpu.pipeline_mode<synchronous>, transform_indices = @transform_1, window_bounds = array<i64: 2, 32>}, {pipeline_mode = #tpu.pipeline_mode<synchronous>, transform_indices = @transform_2, window_bounds = array<i64: 2, 1>}, {pipeline_mode = #tpu.pipeline_mode<synchronous>, transform_indices = @transform_3, window_bounds = array<i64: 32, 2>}, {pipeline_mode = #tpu.pipeline_mode<synchronous>, transform_indices = @transform_4, window_bounds = array<i64: 32, 1>}, {transform_indices = @transform_5, window_bounds = array<i64: 1, 32, 256>}]} {
    %c0 = arith.constant 0 : index
    %c0_0 = arith.constant 0 : index
    %c0_1 = arith.constant 0 : index
    %0 = vector.load %arg1[%c0, %c0_0, %c0_1] : memref<1x32x256xf32, #tpu.memory_space<vmem>>, vector<1x32x256xf32>
    %1 = vector.shape_cast %0 : vector<1x32x256xf32> to vector<32x256xf32>
    %cst = arith.constant dense<0.000000e+00> : vector<32xf32>
    %2 = vector.multi_reduction <add>, %1, %cst [1] : vector<32x256xf32> to vector<32xf32>
    %3 = vector.shape_cast %2 : vector<32xf32> to vector<32x1xf32>
    %cst_2 = arith.constant 2.560000e+02 : f32
    %4 = vector.broadcast %cst_2 : f32 to vector<32x1xf32>
    %5 = arith.divf %3, %4 : vector<32x1xf32>
    %c0_3 = arith.constant 0 : index
    %c0_4 = arith.constant 0 : index
    %6 = vector.load %arg2[%c0_3, %c0_4] : memref<2x32xf32, #tpu.memory_space<vmem>>, vector<2x32xf32>
    %cst_5 = arith.constant dense<0.000000e+00> : vector<2x1xf32>
    %7 = tpu.matmul %6, %5, %cst_5 {dimension_numbers = #tpu.dot_dimension_numbers<[1], [0], [0], [1], [0, 0, 1, 1], [], []>} : vector<2x32xf32>, vector<32x1xf32>, vector<2x1xf32> -> vector<2x1xf32>
    %c0_6 = arith.constant 0 : index
    %c0_7 = arith.constant 0 : index
    %8 = vector.load %arg3[%c0_6, %c0_7] : memref<2x1xf32, #tpu.memory_space<vmem>>, vector<2x1xf32>
    %9 = arith.addf %7, %8 : vector<2x1xf32>
    %cst_8 = arith.constant 0.000000e+00 : f32
    %10 = vector.broadcast %cst_8 : f32 to vector<2x1xf32>
    %11 = arith.maximumf %9, %10 : vector<2x1xf32>
    %c0_9 = arith.constant 0 : index
    %c0_10 = arith.constant 0 : index
    %12 = vector.load %arg4[%c0_9, %c0_10] : memref<32x2xf32, #tpu.memory_space<vmem>>, vector<32x2xf32>
    %cst_11 = arith.constant dense<0.000000e+00> : vector<32x1xf32>
    %13 = tpu.matmul %12, %11, %cst_11 {dimension_numbers = #tpu.dot_dimension_numbers<[1], [0], [0], [1], [0, 0, 1, 1], [], []>} : vector<32x2xf32>, vector<2x1xf32>, vector<32x1xf32> -> vector<32x1xf32>
    %c0_12 = arith.constant 0 : index
    %c0_13 = arith.constant 0 : index
    %14 = vector.load %arg5[%c0_12, %c0_13] : memref<32x1xf32, #tpu.memory_space<vmem>>, vector<32x1xf32>
    %15 = arith.addf %13, %14 : vector<32x1xf32>
    %16 = arith.negf %15 : vector<32x1xf32>
    %17 = math.exp %16 : vector<32x1xf32>
    %cst_14 = arith.constant 1.000000e+00 : f32
    %18 = vector.broadcast %cst_14 : f32 to vector<32x1xf32>
    %19 = arith.addf %18, %17 : vector<32x1xf32>
    %20 = arith.divf %18, %19 : vector<32x1xf32>
    %21 = vector.broadcast %20 : vector<32x1xf32> to vector<32x256xf32>
    %22 = arith.mulf %1, %21 : vector<32x256xf32>
    %c0_15 = arith.constant 0 : index
    %c0_16 = arith.constant 0 : index
    %c0_17 = arith.constant 0 : index
    %23 = vector.load %arg6[%c0_15, %c0_16, %c0_17] : memref<1x32x256xf32, #tpu.memory_space<vmem>>, vector<1x32x256xf32>
    %24 = vector.shape_cast %23 : vector<1x32x256xf32> to vector<32x256xf32>
    %25 = vector.shape_cast %22 : vector<32x256xf32> to vector<1x32x256xf32>
    tpu.vector_store %arg6[%c0_15, %c0_16, %c0_17], %25 {strides = array<i32>} : memref<1x32x256xf32, #tpu.memory_space<vmem>>, vector<1x32x256xf32>,
    return
  }
  func.func @transform_0(%arg0: i32) -> (i32, i32, i32) {
    %c0_i32 = arith.constant 0 : i32
    %c0_i32_0 = arith.constant 0 : i32
    %c0_i32_1 = arith.constant 0 : i32
    return %arg0, %c0_i32, %c0_i32_0 : i32, i32, i32
  }
  func.func @transform_1(%arg0: i32) -> (i32, i32) {
    %c0_i32 = arith.constant 0 : i32
    %c0_i32_0 = arith.constant 0 : i32
    %c0_i32_1 = arith.constant 0 : i32
    return %c0_i32, %c0_i32_0 : i32, i32
  }
  func.func @transform_2(%arg0: i32) -> (i32, i32) {
    %c0_i32 = arith.constant 0 : i32
    %c0_i32_0 = arith.constant 0 : i32
    %c0_i32_1 = arith.constant 0 : i32
    return %c0_i32, %c0_i32_0 : i32, i32
  }
  func.func @transform_3(%arg0: i32) -> (i32, i32) {
    %c0_i32 = arith.constant 0 : i32
    %c0_i32_0 = arith.constant 0 : i32
    %c0_i32_1 = arith.constant 0 : i32
    return %c0_i32, %c0_i32_0 : i32, i32
  }
  func.func @transform_4(%arg0: i32) -> (i32, i32) {
    %c0_i32 = arith.constant 0 : i32
    %c0_i32_0 = arith.constant 0 : i32
    %c0_i32_1 = arith.constant 0 : i32
    return %c0_i32, %c0_i32_0 : i32, i32
  }
  func.func @transform_5(%arg0: i32) -> (i32, i32, i32) {
    %c0_i32 = arith.constant 0 : i32
    %c0_i32_0 = arith.constant 0 : i32
    %c0_i32_1 = arith.constant 0 : i32
    return %arg0, %c0_i32, %c0_i32_0 : i32, i32, i32
  }
}

</mosaic_0001>

<llo_original>
// kernel: channel_attention.1
$region0: #{channel_attention.1}
  #allocation0 [shape = 'u32[]', space=smem, size = 0x4, offset = 0x4, fixed_abs, tag = 'smem constant byte address 0x4 - core index']
  #allocation1 [shape = 'u32[144,128]{1,0:T(1,128)}', space=vmem, size = 0x12000, scoped, tag = 'internal scratch']
  %s0 = inlined_call_operand.vmem [shape: f32[2,32,256], index: 0, kind: input, shape index: {}]
  %s1 = inlined_call_operand.vmem [shape: f32[2,32], index: 1, kind: input, shape index: {}]
  %s2 = inlined_call_operand.vmem [shape: f32[2,1], index: 2, kind: input, shape index: {}]
  %s3 = inlined_call_operand.vmem [shape: f32[32,2], index: 3, kind: input, shape index: {}]
  %s4 = inlined_call_operand.vmem [shape: f32[32,1], index: 4, kind: input, shape index: {}]
  %s5 = inlined_call_operand.vmem [shape: f32[2,32,256], index: 5, kind: output, shape index: {}]
  %s6 = sld [smem:[#allocation0]]
  $region53: #{channel_attention.1} parent=0
    _
  %s8 = ssub.s32 1, %s6
  %s9 = scalar_select 0, %s8, %s6
  loop: start=0, step=1, limit=4
  $region2: #{channel_attention.1} parent=0 // loop_pre_header
    _
  $region3: #{channel_attention.1} parent=0 // loop_header
    %s11 = sphi 0, %s15
    %p12 = scmp.ge.s32.totalorder %s11, 4
    %s21 = sphi 0, %s23
    %s24 = sphi 0, %s21
    %s25 = sphi 0, %s24
    %s41 = sphi 0, %s25
    %s45 = sphi 0, %s45
    %s47 = sphi 0, %s45
    %s48 = sphi 0, %s47
    %s62 = sphi 0, %s48
    %s66 = sphi 0, %s66
    %s68 = sphi 0, %s66
    %s69 = sphi 0, %s68
    %s83 = sphi 0, %s69
    %s87 = sphi 0, %s87
    %s89 = sphi 0, %s87
    %s90 = sphi 0, %s89
    %s104 = sphi 0, %s90
    %s108 = sphi 0, %s108
    %s110 = sphi 0, %s108
    %s111 = sphi 0, %s110
    %s125 = sphi 0, %s111
    %s131 = sphi 0, %s133
    %s134 = sphi 0, %s131
    %s135 = sphi 0, %s134
    %s151 = sphi 0, %s135
  $region4: #{channel_attention.1} parent=0 // loop_header_branch
    %14 = sbr.rel (%p12) target = $region8
  $region5: #{channel_attention.1} parent=0 // loop_body
    %s16 = ssub.s32 %s11, 1
    %s17 = ssub.s32 %s11, 2
    %s18 = sadd.s32 %s11, 1
    %s19 = ssub.s32 %s11, %s18
    %p20 = scmp.eq.s32.totalorder %s19, 0
    %s22 = sadd.s32 %s21, 1
    %s23 = scalar_select %p20, %s21, %s22
    %p26 = pneg %p20
    %p27 = scmp.eq.s32.totalorder %s11, 1
    %p28 = por %p26, %p27
    %p29 = scmp.ne.s32.totalorder %s21, %s24
    %p30 = scmp.eq.s32.totalorder %s11, 0
    %p31 = por %p29, %p30
    %p32 = scmp.ne.s32.totalorder %s21, %s24
    %p33 = scmp.eq.s32.totalorder %s16, 1
    %p34 = por %p32, %p33
    %p35 = scmp.ne.s32.totalorder %s24, %s25
    %p36 = scmp.eq.s32.totalorder %s16, 0
    %p37 = por %p35, %p36
    %p38 = scmp.ne.s32.totalorder %s24, %s25
    %p39 = scmp.eq.s32.totalorder %s17, 1
    %p40 = por %p38, %p39
    %p42 = scmp.ne.s32.totalorder %s25, %s41
    %p43 = scmp.eq.s32.totalorder %s17, 0
    %p44 = por %p42, %p43
    %s46 = sadd.s32 %s45, 1
    %p49 = scmp.eq.s32.totalorder %s11, 1
    %p50 = scmp.ne.s32.totalorder %s45, %s47
    %p51 = scmp.eq.s32.totalorder %s11, 0
    %p52 = por %p50, %p51
    %p53 = scmp.ne.s32.totalorder %s45, %s47
    %p54 = scmp.eq.s32.totalorder %s16, 1
    %p55 = por %p53, %p54
    %p56 = scmp.ne.s32.totalorder %s47, %s48
    %p57 = scmp.eq.s32.totalorder %s16, 0
    %p58 = por %p56, %p57
    %p59 = scmp.ne.s32.totalorder %s47, %s48
    %p60 = scmp.eq.s32.totalorder %s17, 1
    %p61 = por %p59, %p60
    %p63 = scmp.ne.s32.totalorder %s48, %s62
    %p64 = scmp.eq.s32.totalorder %s17, 0
    %p65 = por %p63, %p64
    %s67 = sadd.s32 %s66, 1
    %p70 = scmp.eq.s32.totalorder %s11, 1
    %p71 = scmp.ne.s32.totalorder %s66, %s68
    %p72 = scmp.eq.s32.totalorder %s11, 0
    %p73 = por %p71, %p72
    %p74 = scmp.ne.s32.totalorder %s66, %s68
    %p75 = scmp.eq.s32.totalorder %s16, 1
    %p76 = por %p74, %p75
    %p77 = scmp.ne.s32.totalorder %s68, %s69
    %p78 = scmp.eq.s32.totalorder %s16, 0
    %p79 = por %p77, %p78
    %p80 = scmp.ne.s32.totalorder %s68, %s69
    %p81 = scmp.eq.s32.totalorder %s17, 1
    %p82 = por %p80, %p81
    %p84 = scmp.ne.s32.totalorder %s69, %s83
    %p85 = scmp.eq.s32.totalorder %s17, 0
    %p86 = por %p84, %p85
    %s88 = sadd.s32 %s87, 1
    %p91 = scmp.eq.s32.totalorder %s11, 1
    %p92 = scmp.ne.s32.totalorder %s87, %s89
    %p93 = scmp.eq.s32.totalorder %s11, 0
    %p94 = por %p92, %p93
    %p95 = scmp.ne.s32.totalorder %s87, %s89
    %p96 = scmp.eq.s32.totalorder %s16, 1
    %p97 = por %p95, %p96
    %p98 = scmp.ne.s32.totalorder %s89, %s90
    %p99 = scmp.eq.s32.totalorder %s16, 0
    %p100 = por %p98, %p99
    %p101 = scmp.ne.s32.totalorder %s89, %s90
    %p102 = scmp.eq.s32.totalorder %s17, 1
    %p103 = por %p101, %p102
    %p105 = scmp.ne.s32.totalorder %s90, %s104
    %p106 = scmp.eq.s32.totalorder %s17, 0
    %p107 = por %p105, %p106
    %s109 = sadd.s32 %s108, 1
    %p112 = scmp.eq.s32.totalorder %s11, 1
    %p113 = scmp.ne.s32.totalorder %s108, %s110
    %p114 = scmp.eq.s32.totalorder %s11, 0
    %p115 = por %p113, %p114
    %p116 = scmp.ne.s32.totalorder %s108, %s110
    %p117 = scmp.eq.s32.totalorder %s16, 1
    %p118 = por %p116, %p117
    %p119 = scmp.ne.s32.totalorder %s110, %s111
    %p120 = scmp.eq.s32.totalorder %s16, 0
    %p121 = por %p119, %p120
    %p122 = scmp.ne.s32.totalorder %s110, %s111
    %p123 = scmp.eq.s32.totalorder %s17, 1
    %p124 = por %p122, %p123
    %p126 = scmp.ne.s32.totalorder %s111, %s125
    %p127 = scmp.eq.s32.totalorder %s17, 0
    %p128 = por %p126, %p127
    %s129 = ssub.s32 %s11, %s18
    %p130 = scmp.eq.s32.totalorder %s129, 0
    %s132 = sadd.s32 %s131, 1
    %s133 = scalar_select %p130, %s131, %s132
    %p136 = pneg %p130
    %p137 = scmp.eq.s32.totalorder %s11, 1
    %p138 = por %p136, %p137
    %p139 = scmp.ne.s32.totalorder %s131, %s134
    %p140 = scmp.eq.s32.totalorder %s11, 0
    %p141 = por %p139, %p140
    %p142 = scmp.ne.s32.totalorder %s131, %s134
    %p143 = scmp.eq.s32.totalorder %s16, 1
    %p144 = por %p142, %p143
    %p145 = scmp.ne.s32.totalorder %s134, %s135
    %p146 = scmp.eq.s32.totalorder %s16, 0
    %p147 = por %p145, %p146
    %p148 = scmp.ne.s32.totalorder %s134, %s135
    %p149 = scmp.eq.s32.totalorder %s17, 1
    %p150 = por %p148, %p149
    %p152 = scmp.ne.s32.totalorder %s135, %s151
    %p153 = scmp.eq.s32.totalorder %s17, 0
    %p154 = por %p152, %p153
    %p155 = scmp.le.s32.totalorder 1, %s11
    %p156 = scmp.lt.s32.totalorder %s11, 3
    %p157 = pnand %p155, %p156
    %p158 = pneg %p157
    // Predicated region
    $region9: #{channel_attention.1} parent=5 // pred_check
      _
    $region10: #{channel_attention.1} parent=5 // pred_check_branch
      %160 = sbr.rel (%p157) target = $region12
    $region11: #{channel_attention.1} parent=5 // pred_region
      %s161 = ssub.s32 %s11, 1
      // Predicated region
      $region13: #{channel_attention.1} parent=11 // pred_check
        %p162 = pneg %p58
      $region14: #{channel_attention.1} parent=11 // pred_check_branch
        %164 = sbr.rel (%p162) target = $region16
      $region15: #{channel_attention.1} parent=11 // pred_region
        _
      $region16: #{channel_attention.1} parent=11 // pred_fallthru
        _
      // Predicated region
      $region17: #{channel_attention.1} parent=11 // pred_check
        %p165 = pneg %p79
      $region18: #{channel_attention.1} parent=11 // pred_check_branch
        %167 = sbr.rel (%p165) target = $region20
      $region19: #{channel_attention.1} parent=11 // pred_region
        _
      $region20: #{channel_attention.1} parent=11 // pred_fallthru
        _
      // Predicated region
      $region21: #{channel_attention.1} parent=11 // pred_check
        %p168 = pneg %p100
      $region22: #{channel_attention.1} parent=11 // pred_check_branch
        %170 = sbr.rel (%p168) target = $region24
      $region23: #{channel_attention.1} parent=11 // pred_region
        _
      $region24: #{channel_attention.1} parent=11 // pred_fallthru
        _
      // Predicated region
      $region25: #{channel_attention.1} parent=11 // pred_check
        %p171 = pneg %p121
      $region26: #{channel_attention.1} parent=11 // pred_check_branch
        %173 = sbr.rel (%p171) target = $region28
      $region27: #{channel_attention.1} parent=11 // pred_region
        _
      $region28: #{channel_attention.1} parent=11 // pred_fallthru
        _
    $region12: #{channel_attention.1} parent=5 // pred_fallthru
      _
    %p174 = scmp.lt.s32.totalorder %s11, 2
    // Predicated region
    $region29: #{channel_attention.1} parent=5 // pred_check
      %p175 = pneg %p174
    $region30: #{channel_attention.1} parent=5 // pred_check_branch
      %177 = sbr.rel (%p175) target = $region32
    $region31: #{channel_attention.1} parent=5 // pred_region
      // Predicated region
      $region33: #{channel_attention.1} parent=31 // pred_check
        %p178 = pneg %p31
      $region34: #{channel_attention.1} parent=31 // pred_check_branch
        %180 = sbr.rel (%p178) target = $region36
      $region35: #{channel_attention.1} parent=31 // pred_region
        %p181 = scmp.lt.s32.totalorder %s11, 1
        %s182 = scalar_select %p181, %s11, 1
        %s183 = smul.addr %s182, 8
        %s184 = smul.addr %s183, 8
        %s185 = scalar_lea.vmem %s0, %s184
      $region36: #{channel_attention.1} parent=31 // pred_fallthru
        _
    $region32: #{channel_attention.1} parent=5 // pred_fallthru
      _
    %p186 = scmp.le.s32.totalorder 1, %s11
    %p187 = scmp.lt.s32.totalorder %s11, 3
    %p188 = pnand %p186, %p187
    %p189 = pneg %p188
    // Predicated region
    $region37: #{channel_attention.1} parent=5 // pred_check
      _
    $region38: #{channel_attention.1} parent=5 // pred_check_branch
      %191 = sbr.rel (%p188) target = $region40
    $region39: #{channel_attention.1} parent=5 // pred_region
      %s192 = ssub.s32 %s11, 1
      %p193 = scmp.lt.s32.totalorder %s16, 1
      %s194 = scalar_select %p193, %s16, 1
      %s195 = smul.addr %s194, 8
      %s196 = smul.addr %s195, 8
      %s197 = scalar_lea.vmem %s0, %s196
      %p198 = pneg %p37
      %p199 = pneg %p34
      %p200 = pneg %p58
      %p201 = pneg %p55
      %p202 = pneg %p79
      %p203 = pneg %p76
      %p204 = pneg %p100
      %p205 = pneg %p97
      %p206 = pneg %p121
      %p207 = pneg %p118
      %p208 = pneg %p147
      %p209 = pneg %p144
      %p210 = scmp.lt.s32.totalorder %s16, 1
      %s211 = scalar_select %p210, %s16, 1
      %s212 = smul.addr %s211, 8
      %s213 = smul.addr %s212, 8
      %s214 = scalar_lea.vmem %s5, %s213
      %p215 = scmp.lt.s32.totalorder %s16, 1
      %s216 = scalar_select %p215, %s16, 1
      %s217 = smul.addr %s216, 8
      %s218 = smul.addr %s217, 8
      %s219 = scalar_lea.vmem %s0, %s218
      %p220 = scmp.lt.s32.totalorder %s16, 1
      %s221 = scalar_select %p220, %s16, 1
      %s222 = smul.addr %s221, 8
      %s223 = smul.addr %s222, 8
      %s224 = scalar_lea.vmem %s5, %s223
      %v225 = vld [vmem:[%s219] sm:$0xff]
      %v226 = vld [vmem:[%s219 + $0x8] sm:$0xff]
      %v227 = vld [vmem:[%s219 + $0x10] sm:$0xff]
      %v228 = vld [vmem:[%s219 + $0x18] sm:$0xff]
      %v229 = vld [vmem:[%s219 + $0x20] sm:$0xff]
      %v230 = vld [vmem:[%s219 + $0x28] sm:$0xff]
      %v231 = vld [vmem:[%s219 + $0x30] sm:$0xff]
      %v232 = vld [vmem:[%s219 + $0x38] sm:$0xff]
      %v233 = vadd.f32 %v225, %v226
      %234 = vadd.xlane.f32.xlu0 %v233
      %v235 = vpop.xlane.xlu0 %234
      %v236 = vadd.f32 %v227, %v228
      %237 = vadd.xlane.f32.xlu0 %v236
      %v238 = vpop.xlane.xlu0 %237
      %v239 = vadd.f32 %v229, %v230
      %240 = vadd.xlane.f32.xlu0 %v239
      %v241 = vpop.xlane.xlu0 %240
      %v242 = vadd.f32 %v231, %v232
      %243 = vadd.xlane.f32.xlu0 %v242
      %v244 = vpop.xlane.xlu0 %243
      %v245 = vrcp.pop 256.0
      %v246 = vmul.f32 %v235, %v245
      %v247 = vmul.f32 %v238, %v245
      %v248 = vmul.f32 %v241, %v245
      %v249 = vmul.f32 %v244, %v245
      %v250 = vld [vmem:[%s1] sm:$0x3]
      %v251 = vld [vmem:[%s2] sm:$0x3]
      %vm252 = vcmask 261120
      %v254 = vsel %vm252, %v250, 0
      %256 = vmatprep.subr.mxu0 0.0
      %257 = vmatpush1.msra.mxu0 %v246
      %258 = vmatprep.subr.mxu0 0.0
      %259 = vmatpush1.msra.mxu0 %v247
      %260 = vmatprep.subr.mxu0 0.0
      %261 = vmatpush1.msra.mxu0 %v248
      %262 = vmatprep.subr.mxu0 0.0
      %263 = vmatpush1.msra.mxu0 %v249
      %264 = vmatprep.subr.mxu0 0.0
      %265 = vmatpush1.msra.mxu0 0.0
      %266 = vmatprep.subr.mxu0 0.0
      %267 = vmatpush1.msra.mxu0 0.0
      %268 = vmatprep.subr.mxu0 0.0
      %269 = vmatpush1.msra.mxu0 0.0
      %270 = vmatprep.subr.mxu0 0.0
      %271 = vmatpush1.msra.mxu0 0.0
      %272 = vmatprep.subr.mxu0 0.0
      %273 = vmatpush1.msra.mxu0 0.0
      %274 = vmatprep.subr.mxu0 0.0
      %275 = vmatpush1.msra.mxu0 0.0
      %276 = vmatprep.subr.mxu0 0.0
      %277 = vmatpush1.msra.mxu0 0.0
      %278 = vmatprep.subr.mxu0 0.0
      %279 = vmatpush1.msra.mxu0 0.0
      %280 = vmatprep.subr.mxu0 0.0
      %281 = vmatpush1.msra.mxu0 0.0
      %282 = vmatprep.subr.mxu0 0.0
      %283 = vmatpush1.msra.mxu0 0.0
      %284 = vmatprep.subr.mxu0 0.0
      %285 = vmatpush1.msra.mxu0 0.0
      %286 = vmatprep.subr.mxu0 0.0
      %287 = vmatpush1.msra.mxu0 0.0
      %288 = vmatprep.subr.mxu0 0.0
      %289 = vmatpush1.msra.mxu0 0.0
      %290 = vmatprep.subr.mxu0 0.0
      %291 = vmatpush1.msra.mxu0 0.0
      %292 = vmatprep.subr.mxu0 0.0
      %293 = vmatpush1.msra.mxu0 0.0
      %294 = vmatprep.subr.mxu0 0.0
      %295 = vmatpush1.msra.mxu0 0.0
      %296 = vmatprep.subr.mxu0 0.0
      %297 = vmatpush1.msra.mxu0 0.0
      %298 = vmatprep.subr.mxu0 0.0
      %299 = vmatpush1.msra.mxu0 0.0
      %300 = vmatprep.subr.mxu0 0.0
      %301 = vmatpush1.msra.mxu0 0.0
      %302 = vmatprep.subr.mxu0 0.0
      %303 = vmatpush1.msra.mxu0 0.0
      %304 = vmatprep.subr.mxu0 0.0
      %305 = vmatpush1.msra.mxu0 0.0
      %306 = vmatprep.subr.mxu0 0.0
      %307 = vmatpush1.msra.mxu0 0.0
      %308 = vmatprep.subr.mxu0 0.0
      %309 = vmatpush1.msra.mxu0 0.0
      %310 = vmatprep.subr.mxu0 0.0
      %311 = vmatpush1.msra.mxu0 0.0
      %312 = vmatprep.subr.mxu0 0.0
      %313 = vmatpush1.msra.mxu0 0.0
      %314 = vmatprep.subr.mxu0 0.0
      %315 = vmatpush1.msra.mxu0 0.0
      %316 = vmatprep.subr.mxu0 0.0
      %317 = vmatpush1.msra.mxu0 0.0
      %318 = vmatprep.subr.mxu0 0.0
      %319 = vmatpush1.msra.mxu0 0.0
      %320 = vmatprep.mubr.f32.mxu0 0.0
      %321 = vmatmul.mubr.f32.gmra.mrb[0].mxu0 %v254
      %v322 = vpop.f32.mrb[0].mxu0
      %v323 = vadd.f32 %v251, %v322
      %v324 = vpop.f32.mrb[0].mxu0
      %325 = vdwg.mxu0
      %v326 = vmax.f32 %v323, 0.0
      %v327 = vld [vmem:[%s3] sm:$0xff]
      %v328 = vld [vmem:[%s3 + $0x8] sm:$0xff]
      %v329 = vld [vmem:[%s3 + $0x10] sm:$0xff]
      %v330 = vld [vmem:[%s3 + $0x18] sm:$0xff]
      %v331 = vld [vmem:[%s4] sm:$0xff]
      %v332 = vld [vmem:[%s4 + $0x8] sm:$0xff]
      %v333 = vld [vmem:[%s4 + $0x10] sm:$0xff]
      %v334 = vld [vmem:[%s4 + $0x18] sm:$0xff]
      %vm335 = vcmask 15360
      %v337 = vsel %vm335, %v327, 0
      %v340 = vsel %vm335, %v328, 0
      %v343 = vsel %vm335, %v329, 0
      %v346 = vsel %vm335, %v330, 0
      %vm348 = vcmask 1041408
      %v350 = vsel %vm348, %v326, 0
      %352 = vmatprep.subr.mxu0 0.0
      %353 = vmatpush1.msra.mxu0 %v350
      %354 = vmatprep.subr.mxu0 0.0
      %355 = vmatpush1.msra.mxu0 0.0
      %356 = vmatprep.subr.mxu0 0.0
      %357 = vmatpush1.msra.mxu0 0.0
      %358 = vmatprep.subr.mxu0 0.0
      %359 = vmatpush1.msra.mxu0 0.0
      %360 = vmatprep.subr.mxu0 0.0
      %361 = vmatpush1.msra.mxu0 0.0
      %362 = vmatprep.subr.mxu0 0.0
      %363 = vmatpush1.msra.mxu0 0.0
      %364 = vmatprep.subr.mxu0 0.0
      %365 = vmatpush1.msra.mxu0 0.0
      %366 = vmatprep.subr.mxu0 0.0
      %367 = vmatpush1.msra.mxu0 0.0
      %368 = vmatprep.subr.mxu0 0.0
      %369 = vmatpush1.msra.mxu0 0.0
      %370 = vmatprep.subr.mxu0 0.0
      %371 = vmatpush1.msra.mxu0 0.0
      %372 = vmatprep.subr.mxu0 0.0
      %373 = vmatpush1.msra.mxu0 0.0
      %374 = vmatprep.subr.mxu0 0.0
      %375 = vmatpush1.msra.mxu0 0.0
      %376 = vmatprep.subr.mxu0 0.0
      %377 = vmatpush1.msra.mxu0 0.0
      %378 = vmatprep.subr.mxu0 0.0
      %379 = vmatpush1.msra.mxu0 0.0
      %380 = vmatprep.subr.mxu0 0.0
      %381 = vmatpush1.msra.mxu0 0.0
      %382 = vmatprep.subr.mxu0 0.0
      %383 = vmatpush1.msra.mxu0 0.0
      %384 = vmatprep.subr.mxu0 0.0
      %385 = vmatpush1.msra.mxu0 0.0
      %386 = vmatprep.subr.mxu0 0.0
      %387 = vmatpush1.msra.mxu0 0.0
      %388 = vmatprep.subr.mxu0 0.0
      %389 = vmatpush1.msra.mxu0 0.0
      %390 = vmatprep.subr.mxu0 0.0
      %391 = vmatpush1.msra.mxu0 0.0
      %392 = vmatprep.subr.mxu0 0.0
      %393 = vmatpush1.msra.mxu0 0.0
      %394 = vmatprep.subr.mxu0 0.0
      %395 = vmatpush1.msra.mxu0 0.0
      %396 = vmatprep.subr.mxu0 0.0
      %397 = vmatpush1.msra.mxu0 0.0
      %398 = vmatprep.subr.mxu0 0.0
      %399 = vmatpush1.msra.mxu0 0.0
      %400 = vmatprep.subr.mxu0 0.0
      %401 = vmatpush1.msra.mxu0 0.0
      %402 = vmatprep.subr.mxu0 0.0
      %403 = vmatpush1.msra.mxu0 0.0
      %404 = vmatprep.subr.mxu0 0.0
      %405 = vmatpush1.msra.mxu0 0.0
      %406 = vmatprep.subr.mxu0 0.0
      %407 = vmatpush1.msra.mxu0 0.0
      %408 = vmatprep.subr.mxu0 0.0
      %409 = vmatpush1.msra.mxu0 0.0
      %410 = vmatprep.subr.mxu0 0.0
      %411 = vmatpush1.msra.mxu0 0.0
      %412 = vmatprep.subr.mxu0 0.0
      %413 = vmatpush1.msra.mxu0 0.0
      %414 = vmatprep.subr.mxu0 0.0
      %415 = vmatpush1.msra.mxu0 0.0
      %416 = vmatprep.mubr.f32.mxu0 0.0
      %417 = vmatmul.mubr.f32.gmra.mrb[0].mxu0 %v337
      %v418 = vpop.f32.mrb[0].mxu0
      %v419 = vadd.f32 %v331, %v418
      %v420 = vpop.f32.mrb[0].mxu0
      %421 = vmatprep.mubr.f32.mxu0 0.0
      %422 = vmatmul.mubr.f32.gmra.mrb[0].mxu0 %v340
      %v423 = vpop.f32.mrb[0].mxu0
      %v424 = vadd.f32 %v332, %v423
      %v425 = vpop.f32.mrb[0].mxu0
      %426 = vmatprep.mubr.f32.mxu0 0.0
      %427 = vmatmul.mubr.f32.gmra.mrb[0].mxu0 %v343
      %v428 = vpop.f32.mrb[0].mxu0
      %v429 = vadd.f32 %v333, %v428
      %v430 = vpop.f32.mrb[0].mxu0
      %431 = vmatprep.mubr.f32.mxu0 0.0
      %432 = vmatmul.mubr.f32.gmra.mrb[0].mxu0 %v346
      %v433 = vpop.f32.mrb[0].mxu0
      %v434 = vadd.f32 %v334, %v433
      %v435 = vpop.f32.mrb[0].mxu0
      %436 = vdwg.mxu0
      %v437 = vxor.u32 %v419, 2147483648
      %v438 = vxor.u32 %v424, 2147483648
      %v439 = vxor.u32 %v429, 2147483648
      %v440 = vxor.u32 %v434, 2147483648
      %v441 = vmul.f32 %v437, 1.442695
      %v442 = vpow.pop %v441
      %v443 = vmul.f32 %v438, 1.442695
      %v444 = vpow.pop %v443
      %v445 = vmul.f32 %v439, 1.442695
      %v446 = vpow.pop %v445
      %v447 = vmul.f32 %v440, 1.442695
      %v448 = vpow.pop %v447
      %v449 = vadd.f32 %v442, 1.0
      %v450 = vadd.f32 %v444, 1.0
      %v451 = vadd.f32 %v446, 1.0
      %v452 = vadd.f32 %v448, 1.0
      %v453 = vrcp.pop %v449
      %v454 = vmul.f32 1.0, %v453
      %v455 = vrcp.pop %v450
      %v456 = vmul.f32 1.0, %v455
      %v457 = vrcp.pop %v451
      %v458 = vmul.f32 1.0, %v457
      %v459 = vrcp.pop %v452
      %v460 = vmul.f32 1.0, %v459
      %462 = vset.pattern.permute.xlu0 0
      %463 = vperm.xlu0 %462, %v454
      %v464 = vpop.permute.xlu0 %463
      %467 = vset.pattern.permute.xlu0 0
      %468 = vperm.xlu0 %467, %v456
      %v469 = vpop.permute.xlu0 %468
      %472 = vset.pattern.permute.xlu0 0
      %473 = vperm.xlu0 %472, %v458
      %v474 = vpop.permute.xlu0 %473
      %477 = vset.pattern.permute.xlu0 0
      %478 = vperm.xlu0 %477, %v460
      %v479 = vpop.permute.xlu0 %478
      %v481 = vmul.f32 %v225, %v464
      %v482 = vmul.f32 %v226, %v464
      %v483 = vmul.f32 %v227, %v469
      %v484 = vmul.f32 %v228, %v469
      %v485 = vmul.f32 %v229, %v474
      %v486 = vmul.f32 %v230, %v474
      %v487 = vmul.f32 %v231, %v479
      %v488 = vmul.f32 %v232, %v479
      %489 = vst [vmem:[%s224] sm:$0xff] %v481
      %490 = vst [vmem:[%s224 + $0x8] sm:$0xff] %v482
      %491 = vst [vmem:[%s224 + $0x10] sm:$0xff] %v483
      %492 = vst [vmem:[%s224 + $0x18] sm:$0xff] %v484
      %493 = vst [vmem:[%s224 + $0x20] sm:$0xff] %v485
      %494 = vst [vmem:[%s224 + $0x28] sm:$0xff] %v486
      %495 = vst [vmem:[%s224 + $0x30] sm:$0xff] %v487
      %496 = vst [vmem:[%s224 + $0x38] sm:$0xff] %v488
      %p497 = scmp.lt.s32.totalorder %s16, 1
      %s498 = scalar_select %p497, %s16, 1
      %s499 = smul.addr %s498, 8
      %s500 = smul.addr %s499, 8
      %s501 = scalar_lea.vmem %s5, %s500
      // Predicated region
      $region41: #{channel_attention.1} parent=39 // pred_check
        %p502 = pneg %p144
      $region42: #{channel_attention.1} parent=39 // pred_check_branch
        %504 = sbr.rel (%p502) target = $region44
      $region43: #{channel_attention.1} parent=39 // pred_region
        _
      $region44: #{channel_attention.1} parent=39 // pred_fallthru
        _
    $region40: #{channel_attention.1} parent=5 // pred_fallthru
      _
    %p505 = scmp.le.s32.totalorder 2, %s11
    // Predicated region
    $region45: #{channel_attention.1} parent=5 // pred_check
      %p506 = pneg %p505
    $region46: #{channel_attention.1} parent=5 // pred_check_branch
      %508 = sbr.rel (%p506) target = $region48
    $region47: #{channel_attention.1} parent=5 // pred_region
      %s509 = ssub.s32 %s11, 2
      // Predicated region
      $region49: #{channel_attention.1} parent=47 // pred_check
        %p510 = pneg %p150
      $region50: #{channel_attention.1} parent=47 // pred_check_branch
        %512 = sbr.rel (%p510) target = $region52
      $region51: #{channel_attention.1} parent=47 // pred_region
        %p513 = scmp.lt.s32.totalorder %s17, 1
        %s514 = scalar_select %p513, %s17, 1
        %s515 = smul.addr %s514, 8
        %s516 = smul.addr %s515, 8
        %s517 = scalar_lea.vmem %s5, %s516
      $region52: #{channel_attention.1} parent=47 // pred_fallthru
        _
    $region48: #{channel_attention.1} parent=5 // pred_fallthru
      _
  $region6: #{channel_attention.1} parent=0 // loop_footer
    %s15 = sadd.s32 1, %s11
  $region7: #{channel_attention.1} parent=0 // loop_footer_branch
    %10 = sbr.rel target = $region3
  $region8: #{channel_attention.1} parent=0 // loop_exit
    _

</llo_original>
